<compile_context>
chip_gen: v7x
topology: tpu7x:2x2x1
jax: 0.10.0
libtpu: 0.0.40
codegen_flags: <defaults>
</compile_context>

<pallas_src>
import functools

import jax
import jax.numpy as jnp
from jax.experimental import pallas as pl
from jax.experimental.pallas import tpu as pltpu


def _round_up(x, m):
    return ((x + m - 1) // m) * m


def _vmem_capacity_bytes():
    try:
        info = pltpu.get_tpu_info()
        for attr in ("vmem_capacity_bytes", "vmem_capacity", "vmem_bytes"):
            cap = getattr(info, attr, None)
            if cap:
                return int(cap)
    except Exception:
        pass
    return 64 * 1024 * 1024  # conservative (v7x per-TC)


def _pick_token_tile(tokens, sub, tm_pref, want_two_steps):
    """Choose a token tile minimizing pad waste; optionally force >=2 steps."""
    tokens_min = _round_up(max(tokens, sub), sub)
    cands = sorted({c for c in (tm_pref, 512, 256, 128, 64, 32, 16, 8)
                    if c <= tm_pref and c % sub == 0}, reverse=True)
    cands = [c for c in cands if c <= tokens_min] or [sub]
    best = None  # (waste, tm, padded)
    for c in cands:
        padded = _round_up(tokens_min, c)
        waste = padded - tokens
        if best is None or waste < best[0] or (waste == best[0] and c > best[1]):
            best = (waste, c, padded)
    _, tm_eff, tokens_padded = best
    if want_two_steps:
        while (tokens_padded // tm_eff < 2 and tm_eff // 2 >= sub
               and (tm_eff // 2) % sub == 0):
            tm_eff //= 2
    return tm_eff, tokens_padded


def _pick_ff_tile(d_ff, d_model, w_bytes, weight_budget_bytes):
    """Full-resident weights if they fit; otherwise stream d_ff chunks."""
    if 2 * d_model * d_ff * w_bytes <= weight_budget_bytes:
        return d_ff
    for tf in (2048, 1024, 512, 256, 128):
        if d_ff % tf == 0 and 4 * d_model * tf * w_bytes <= weight_budget_bytes:
            return tf
    return d_ff  # no clean divisor: fall back to resident (correctness first)


def _encoder_ff_kernel(x_ref, lnw_ref, wi_ref, wo_ref, o_ref, xn_ref, acc_ref,
                       *, eps):
    # One (tm, D) token tile x one (tf,) d_ff chunk.
    ff = pl.program_id(1)

    @pl.when(ff == 0)
    def _init():
        # T5/Switch RMS norm (no mean subtraction, no bias) in f32; cache the
        # normalized tile once (bf16) for every d_ff chunk, zero accumulator.
        xf = x_ref[...].astype(jnp.float32)
        var = jnp.mean(xf * xf, axis=-1, keepdims=True)
        xn = xf * jax.lax.rsqrt(var + eps) * lnw_ref[...].astype(jnp.float32)
        xn_ref[...] = xn.astype(xn_ref.dtype)
        acc_ref[...] = jnp.zeros_like(acc_ref)

    # wi chunk -> relu -> wo chunk, f32 accumulation on the MXU.
    h = jnp.dot(xn_ref[...], wi_ref[...], preferred_element_type=jnp.float32)
    h = jnp.maximum(h, 0.0).astype(wo_ref.dtype)     # bf16 intermediate
    acc_ref[...] += jnp.dot(h, wo_ref[...], preferred_element_type=jnp.float32)

    @pl.when(ff == pl.num_programs(1) - 1)
    def _finalize():
        # Residual: re-read x_ref (already in VMEM) — no f32 copy kept live
        # across both matmuls.
        o_ref[...] = (x_ref[...].astype(jnp.float32)
                      + acc_ref[...]).astype(o_ref.dtype)


def encoder_ff_pipe(encoder_hidden_states,
                    encoder_position_bias,
                    extended_encoder_attention_mask,
                    decoder_input_ids,
                    decoder_attention_mask,
                    encoder_attention_mask,
                    *,
                    layer_norm_weight,     # (d_model,)
                    wi_t,                  # (d_model, d_ff)  == wi.weight.T
                    wo_t,                  # (d_ff, d_model)  == wo.weight.T
                    eps=1e-6,
                    tm=None,               # token tile; None -> auto per chip
                    compute_dtype=jnp.bfloat16):
    B, S, D = encoder_hidden_states.shape
    d_ff = wi_t.shape[1]
    tokens = B * S

    # Weights should already arrive in compute_dtype (cast once at init time);
    # only cast here if they do not.
    wi_c = wi_t if wi_t.dtype == compute_dtype else wi_t.astype(compute_dtype)
    wo_c = wo_t if wo_t.dtype == compute_dtype else wo_t.astype(compute_dtype)
    lnw2d = layer_norm_weight.reshape(1, D).astype(jnp.float32)

    x_bytes = encoder_hidden_states.dtype.itemsize
    out_bytes = x_bytes
    w_bytes = jnp.dtype(compute_dtype).itemsize

    capacity = _vmem_capacity_bytes()
    small_vmem = capacity < (100 << 20)            # v7x-class (64 MiB / TC)
    vmem_cap = max(capacity - (16 << 20), 32 << 20)

    # Token tile: large tiles amortize ~0.35us/step pipeline overhead; on
    # 2-TC chips make sure the 'parallel' token axis has >=2 steps.
    sub = 16 if encoder_hidden_states.dtype == jnp.bfloat16 else 8
    tm_pref = tm if tm is not None else (256 if small_vmem else 512)
    tm_eff, tokens_padded = _pick_token_tile(tokens, sub, tm_pref,
                                             want_two_steps=small_vmem)

    # d_ff chunking (reduction axis) when weights don't comfortably fit VMEM.
    tf = _pick_ff_tile(d_ff, D, w_bytes, vmem_cap // 2)
    nf = d_ff // tf

    x2d = encoder_hidden_states.reshape(tokens, D)
    if tokens_padded != tokens:
        # Zero rows are numerically benign (var=0 -> xn=0 -> output row 0).
        x2d = jnp.pad(x2d, ((0, tokens_padded - tokens), (0, 0)))

    # VMEM budget: double-buffered x/out tiles, weight chunks, scratches,
    # matmul intermediates; 1.5x headroom, capped below physical capacity.
    vmem_needed = (
        2 * tm_eff * D * x_bytes          # x tile (double buffered)
        + 2 * tm_eff * D * out_bytes      # out tile (double buffered)
        + 2 * D * 4                       # LN weight
        + 2 * (D * tf + tf * D) * w_bytes # wi / wo chunks
        + tm_eff * D * 4                  # f32 accumulator scratch
        + tm_eff * D * w_bytes            # cached RMSNorm(x) scratch
        + tm_eff * tf * (4 + w_bytes)     # matmul intermediate (f32 + bf16)
    )
    vmem_limit = int(min(max(vmem_needed + vmem_needed // 2 + (4 << 20),
                             32 << 20), vmem_cap))

    cost = pl.CostEstimate(
        flops=int(4 * tokens_padded * D * d_ff),
        transcendentals=int(tokens_padded),
        bytes_accessed=int(tokens_padded * D * (x_bytes + out_bytes)
                           + 2 * D * d_ff * w_bytes + D * 4),
    )

    def build(single_buffer_resident):
        resident_mode = pl.Buffered(1) if single_buffer_resident else None
        # wi/wo are only "resident" (constant index_map) when nf == 1;
        # when streamed along the reduction axis keep default double buffers.
        weight_mode = resident_mode if nf == 1 else None
        in_specs = [
            pl.BlockSpec((tm_eff, D), lambda i, f: (i, 0)),                 # x tile
            pl.BlockSpec((1, D), lambda i, f: (0, 0),
                         pipeline_mode=resident_mode),                      # LN weight
            pl.BlockSpec((D, tf), lambda i, f: (0, f),
                         pipeline_mode=weight_mode),                        # wi^T chunk
            pl.BlockSpec((tf, D), lambda i, f: (f, 0),
                         pipeline_mode=weight_mode),                        # wo^T chunk
        ]
        return pl.pallas_call(
            functools.partial(_encoder_ff_kernel, eps=eps),
            out_shape=jax.ShapeDtypeStruct((tokens_padded, D),
                                           encoder_hidden_states.dtype),
            grid_spec=pltpu.PrefetchScalarGridSpec(
                num_scalar_prefetch=0,
                grid=(tokens_padded // tm_eff, nf),
                in_specs=in_specs,
                out_specs=pl.BlockSpec((tm_eff, D), lambda i, f: (i, 0)),
                scratch_shapes=[
                    pltpu.VMEM((tm_eff, D), compute_dtype),   # cached RMSNorm(x)
                    pltpu.VMEM((tm_eff, D), jnp.float32),     # f32 accumulator
                ],
            ),
            compiler_params=pltpu.CompilerParams(
                dimension_semantics=("parallel", "arbitrary"),
                vmem_limit_bytes=vmem_limit,
            ),
            cost_estimate=cost,
        )

    try:
        out2d = build(single_buffer_resident=True)(x2d, lnw2d, wi_c, wo_c)
    except Exception:
        # If this Pallas build rejects Buffered(1), retry with defaults.
        out2d = build(single_buffer_resident=False)(x2d, lnw2d, wi_c, wo_c)

    if tokens_padded != tokens:
        out2d = out2d[:tokens]
    new_hidden = out2d.reshape(B, S, D)

    return (new_hidden,
            encoder_position_bias,
            extended_encoder_attention_mask,
            decoder_input_ids,
            decoder_attention_mask,
            encoder_attention_mask)


def _reference(x, lnw, wi_bf, wo_bf, eps=1e-6):
    """Pure-JAX reference mirroring the kernel's precision (bf16 MXU inputs)."""
    # TODO(synk): a pure-f32 PyTorch baseline will differ slightly from the
    #             bf16-MXU path; validate tolerance at model level if needed.
    xf = x.astype(jnp.float32)
    var = jnp.mean(xf * xf, axis=-1, keepdims=True)
    xn = xf * jax.lax.rsqrt(var + eps) * lnw.astype(jnp.float32)
    h = jnp.dot(xn.astype(jnp.bfloat16), wi_bf,
                preferred_element_type=jnp.float32)
    h = jnp.maximum(h, 0.0).astype(jnp.bfloat16)
    y = jnp.dot(h, wo_bf, preferred_element_type=jnp.float32)
    return (xf + y).astype(x.dtype)


if __name__ == "__main__":
    # Small, forward-consistent shapes: batch=2, seq=8, d_model=32, d_ff=64
    B, S, D, F = 2, 8, 32, 64
    key = jax.random.PRNGKey(0)
    k1, k2, k3, k4, k5 = jax.random.split(key, 5)

    encoder_hidden_states = jax.random.normal(k1, (B, S, D), dtype=jnp.float32)
    encoder_position_bias = jax.random.normal(k2, (1, 4, S, S), dtype=jnp.float32)
    extended_encoder_attention_mask = jnp.zeros((B, 1, 1, S), dtype=jnp.float32)
    decoder_input_ids = jax.random.randint(k3, (B, S), 0, 100)
    decoder_attention_mask = jnp.ones((B, S), dtype=jnp.int32)
    encoder_attention_mask = jnp.ones((B, S), dtype=jnp.int32)

    # SwitchDenseActDense: wi (F, D), wo (D, F); LayerNorm weight init = 1.
    layer_norm_weight = jnp.ones((D,), dtype=jnp.float32)
    wi = jax.random.normal(k4, (F, D), dtype=jnp.float32) * 0.05
    wo = jax.random.normal(k5, (D, F), dtype=jnp.float32) * 0.05
    # Pre-transpose and pre-cast ONCE at init time (no per-call HBM cast).
    wi_t = wi.T.astype(jnp.bfloat16)   # (D, F)
    wo_t = wo.T.astype(jnp.bfloat16)   # (F, D)

    outs = encoder_ff_pipe(
        encoder_hidden_states,
        encoder_position_bias,
        extended_encoder_attention_mask,
        decoder_input_ids,
        decoder_attention_mask,
        encoder_attention_mask,
        layer_norm_weight=layer_norm_weight,
        wi_t=wi_t,
        wo_t=wo_t,
    )
    new_hidden = jax.block_until_ready(outs[0])

    ref = _reference(encoder_hidden_states.reshape(B * S, D),
                     layer_norm_weight, wi_t, wo_t).reshape(B, S, D)
    assert jnp.allclose(new_hidden, ref, atol=1e-2, rtol=1e-2), "mismatch vs reference"
    assert outs[1] is encoder_position_bias
    assert outs[3] is decoder_input_ids
    assert outs[4] is decoder_attention_mask
    assert outs[5] is encoder_attention_mask

    print("KERNEL_OK")
</pallas_src>

<mosaic_0001>
module attributes {stable_mosaic.version = 11 : i64} {
  func.func @_encoder_ff_kernel(%arg0: i32, %arg1: i32, %arg2: memref<8x32xf32, #tpu.memory_space<vmem>>, %arg3: memref<1x32xf32, #tpu.memory_space<vmem>>, %arg4: memref<32x64xbf16, #tpu.memory_space<vmem>>, %arg5: memref<64x32xbf16, #tpu.memory_space<vmem>>, %arg6: memref<8x32xf32, #tpu.memory_space<vmem>>, %arg7: memref<8x32xbf16, #tpu.memory_space<vmem>>, %arg8: memref<8x32xf32, #tpu.memory_space<vmem>>) attributes {dimension_semantics = [#tpu.dimension_semantics<parallel>, #tpu.dimension_semantics<arbitrary>], iteration_bounds = array<i64: 2, 1>, scalar_prefetch = 0 : i64, scratch_operands = 2 : i64, tpu.core_type = #tpu.core_type<tc>, window_params = [{transform_indices = @transform_0, window_bounds = array<i64: 8, 32>}, {pipeline_mode = #tpu.pipeline_mode<synchronous>, transform_indices = @transform_1, window_bounds = array<i64: 1, 32>}, {pipeline_mode = #tpu.pipeline_mode<synchronous>, transform_indices = @transform_2, window_bounds = array<i64: 32, 64>}, {pipeline_mode = #tpu.pipeline_mode<synchronous>, transform_indices = @transform_3, window_bounds = array<i64: 64, 32>}, {transform_indices = @transform_4, window_bounds = array<i64: 8, 32>}]} {
    %c0_i32 = arith.constant 0 : i32
    %0 = arith.cmpi eq, %arg1, %c0_i32 : i32
    %1 = arith.extui %0 : i1 to i32
    %c0_i32_0 = arith.constant 0 : i32
    %2 = arith.cmpi ne, %1, %c0_i32_0 : i32
    scf.if %2 {
      %c0_14 = arith.constant 0 : index
      %c0_15 = arith.constant 0 : index
      %17 = vector.load %arg2[%c0_14, %c0_15] : memref<8x32xf32, #tpu.memory_space<vmem>>, vector<8x32xf32>
      %18 = arith.mulf %17, %17 : vector<8x32xf32>
      %cst_16 = arith.constant dense<0.000000e+00> : vector<8xf32>
      %19 = vector.multi_reduction <add>, %18, %cst_16 [1] : vector<8x32xf32> to vector<8xf32>
      %20 = vector.shape_cast %19 : vector<8xf32> to vector<8x1xf32>
      %cst_17 = arith.constant 3.200000e+01 : f32
      %21 = vector.broadcast %cst_17 : f32 to vector<8x1xf32>
      %22 = arith.divf %20, %21 : vector<8x1xf32>
      %cst_18 = arith.constant 9.99999997E-7 : f32
      %23 = vector.broadcast %cst_18 : f32 to vector<8x1xf32>
      %24 = arith.addf %22, %23 : vector<8x1xf32>
      %25 = math.rsqrt %24 : vector<8x1xf32>
      %26 = vector.broadcast %25 : vector<8x1xf32> to vector<8x32xf32>
      %27 = arith.mulf %17, %26 : vector<8x32xf32>
      %c0_19 = arith.constant 0 : index
      %c0_20 = arith.constant 0 : index
      %28 = vector.load %arg3[%c0_19, %c0_20] : memref<1x32xf32, #tpu.memory_space<vmem>>, vector<1x32xf32>
      %29 = vector.broadcast %28 : vector<1x32xf32> to vector<8x32xf32>
      %30 = arith.mulf %27, %29 : vector<8x32xf32>
      %31 = arith.truncf %30 : vector<8x32xf32> to vector<8x32xbf16>
      %c0_21 = arith.constant 0 : index
      %c0_22 = arith.constant 0 : index
      %32 = vector.load %arg7[%c0_21, %c0_22] : memref<8x32xbf16, #tpu.memory_space<vmem>>, vector<8x32xbf16>
      tpu.vector_store %arg7[%c0_21, %c0_22], %31 {strides = array<i32>} : memref<8x32xbf16, #tpu.memory_space<vmem>>, vector<8x32xbf16>,
      %cst_23 = arith.constant 0.000000e+00 : f32
      %33 = vector.broadcast %cst_23 : f32 to vector<8x32xf32>
      %c0_24 = arith.constant 0 : index
      %c0_25 = arith.constant 0 : index
      %34 = vector.load %arg8[%c0_24, %c0_25] : memref<8x32xf32, #tpu.memory_space<vmem>>, vector<8x32xf32>
      tpu.vector_store %arg8[%c0_24, %c0_25], %33 {strides = array<i32>} : memref<8x32xf32, #tpu.memory_space<vmem>>, vector<8x32xf32>,
    } else {
    }
    %c0 = arith.constant 0 : index
    %c0_1 = arith.constant 0 : index
    %3 = vector.load %arg7[%c0, %c0_1] : memref<8x32xbf16, #tpu.memory_space<vmem>>, vector<8x32xbf16>
    %c0_2 = arith.constant 0 : index
    %c0_3 = arith.constant 0 : index
    %4 = vector.load %arg4[%c0_2, %c0_3] : memref<32x64xbf16, #tpu.memory_space<vmem>>, vector<32x64xbf16>
    %cst = arith.constant dense<0.000000e+00> : vector<8x64xf32>
    %5 = tpu.matmul %3, %4, %cst {dimension_numbers = #tpu.dot_dimension_numbers<[1], [0], [0], [1], [0, 0, 1, 1], [], []>} : vector<8x32xbf16>, vector<32x64xbf16>, vector<8x64xf32> -> vector<8x64xf32>
    %cst_4 = arith.constant 0.000000e+00 : f32
    %6 = vector.broadcast %cst_4 : f32 to vector<8x64xf32>
    %7 = arith.maximumf %5, %6 : vector<8x64xf32>
    %8 = arith.truncf %7 : vector<8x64xf32> to vector<8x64xbf16>
    %c0_5 = arith.constant 0 : index
    %c0_6 = arith.constant 0 : index
    %9 = vector.load %arg8[%c0_5, %c0_6] : memref<8x32xf32, #tpu.memory_space<vmem>>, vector<8x32xf32>
    %c0_7 = arith.constant 0 : index
    %c0_8 = arith.constant 0 : index
    %10 = vector.load %arg5[%c0_7, %c0_8] : memref<64x32xbf16, #tpu.memory_space<vmem>>, vector<64x32xbf16>
    %cst_9 = arith.constant dense<0.000000e+00> : vector<8x32xf32>
    %11 = tpu.matmul %8, %10, %cst_9 {dimension_numbers = #tpu.dot_dimension_numbers<[1], [0], [0], [1], [0, 0, 1, 1], [], []>} : vector<8x64xbf16>, vector<64x32xbf16>, vector<8x32xf32> -> vector<8x32xf32>
    %12 = arith.addf %9, %11 : vector<8x32xf32>
    %c0_10 = arith.constant 0 : index
    %c0_11 = arith.constant 0 : index
    %13 = vector.load %arg8[%c0_10, %c0_11] : memref<8x32xf32, #tpu.memory_space<vmem>>, vector<8x32xf32>
    tpu.vector_store %arg8[%c0_10, %c0_11], %12 {strides = array<i32>} : memref<8x32xf32, #tpu.memory_space<vmem>>, vector<8x32xf32>,
    %c0_i32_12 = arith.constant 0 : i32
    %14 = arith.cmpi eq, %arg1, %c0_i32_12 : i32
    %15 = arith.extui %14 : i1 to i32
    %c0_i32_13 = arith.constant 0 : i32
    %16 = arith.cmpi ne, %15, %c0_i32_13 : i32
    scf.if %16 {
      %c0_14 = arith.constant 0 : index
      %c0_15 = arith.constant 0 : index
      %17 = vector.load %arg2[%c0_14, %c0_15] : memref<8x32xf32, #tpu.memory_space<vmem>>, vector<8x32xf32>
      %c0_16 = arith.constant 0 : index
      %c0_17 = arith.constant 0 : index
      %18 = vector.load %arg8[%c0_16, %c0_17] : memref<8x32xf32, #tpu.memory_space<vmem>>, vector<8x32xf32>
      %19 = arith.addf %17, %18 : vector<8x32xf32>
      %c0_18 = arith.constant 0 : index
      %c0_19 = arith.constant 0 : index
      %20 = vector.load %arg6[%c0_18, %c0_19] : memref<8x32xf32, #tpu.memory_space<vmem>>, vector<8x32xf32>
      tpu.vector_store %arg6[%c0_18, %c0_19], %19 {strides = array<i32>} : memref<8x32xf32, #tpu.memory_space<vmem>>, vector<8x32xf32>,
    } else {
    }
    return
  }
  func.func @transform_0(%arg0: i32, %arg1: i32) -> (i32, i32) {
    %c0_i32 = arith.constant 0 : i32
    %c0_i32_0 = arith.constant 0 : i32
    return %arg0, %c0_i32 : i32, i32
  }
  func.func @transform_1(%arg0: i32, %arg1: i32) -> (i32, i32) {
    %c0_i32 = arith.constant 0 : i32
    %c0_i32_0 = arith.constant 0 : i32
    %c0_i32_1 = arith.constant 0 : i32
    return %c0_i32, %c0_i32_0 : i32, i32
  }
  func.func @transform_2(%arg0: i32, %arg1: i32) -> (i32, i32) {
    %c0_i32 = arith.constant 0 : i32
    %c0_i32_0 = arith.constant 0 : i32
    return %c0_i32, %arg1 : i32, i32
  }
  func.func @transform_3(%arg0: i32, %arg1: i32) -> (i32, i32) {
    %c0_i32 = arith.constant 0 : i32
    %c0_i32_0 = arith.constant 0 : i32
    return %arg1, %c0_i32 : i32, i32
  }
  func.func @transform_4(%arg0: i32, %arg1: i32) -> (i32, i32) {
    %c0_i32 = arith.constant 0 : i32
    %c0_i32_0 = arith.constant 0 : i32
    return %arg0, %c0_i32 : i32, i32
  }
}

module attributes {stable_mosaic.version = 11 : i64} {
  func.func @_encoder_ff_kernel(%arg0: i32, %arg1: i32, %arg2: memref<8x32xf32, #tpu.memory_space<vmem>>, %arg3: memref<1x32xf32, #tpu.memory_space<vmem>>, %arg4: memref<32x64xbf16, #tpu.memory_space<vmem>>, %arg5: memref<64x32xbf16, #tpu.memory_space<vmem>>, %arg6: memref<8x32xf32, #tpu.memory_space<vmem>>, %arg7: memref<8x32xbf16, #tpu.memory_space<vmem>>, %arg8: memref<8x32xf32, #tpu.memory_space<vmem>>) attributes {dimension_semantics = [#tpu.dimension_semantics<parallel>, #tpu.dimension_semantics<arbitrary>], iteration_bounds = array<i64: 2, 1>, scalar_prefetch = 0 : i64, scratch_operands = 2 : i64, tpu.core_type = #tpu.core_type<tc>, window_params = [{transform_indices = @transform_0, window_bounds = array<i64: 8, 32>}, {pipeline_mode = #tpu.pipeline_mode<synchronous>, transform_indices = @transform_1, window_bounds = array<i64: 1, 32>}, {transform_indices = @transform_2, window_bounds = array<i64: 32, 64>}, {transform_indices = @transform_3, window_bounds = array<i64: 64, 32>}, {transform_indices = @transform_4, window_bounds = array<i64: 8, 32>}]} {
    %c0_i32 = arith.constant 0 : i32
    %0 = arith.cmpi eq, %arg1, %c0_i32 : i32
    %1 = arith.extui %0 : i1 to i32
    %c0_i32_0 = arith.constant 0 : i32
    %2 = arith.cmpi ne, %1, %c0_i32_0 : i32
    scf.if %2 {
      %c0_14 = arith.constant 0 : index
      %c0_15 = arith.constant 0 : index
      %17 = vector.load %arg2[%c0_14, %c0_15] : memref<8x32xf32, #tpu.memory_space<vmem>>, vector<8x32xf32>
      %18 = arith.mulf %17, %17 : vector<8x32xf32>
      %cst_16 = arith.constant dense<0.000000e+00> : vector<8xf32>
      %19 = vector.multi_reduction <add>, %18, %cst_16 [1] : vector<8x32xf32> to vector<8xf32>
      %20 = vector.shape_cast %19 : vector<8xf32> to vector<8x1xf32>
      %cst_17 = arith.constant 3.200000e+01 : f32
      %21 = vector.broadcast %cst_17 : f32 to vector<8x1xf32>
      %22 = arith.divf %20, %21 : vector<8x1xf32>
      %cst_18 = arith.constant 9.99999997E-7 : f32
      %23 = vector.broadcast %cst_18 : f32 to vector<8x1xf32>
      %24 = arith.addf %22, %23 : vector<8x1xf32>
      %25 = math.rsqrt %24 : vector<8x1xf32>
      %26 = vector.broadcast %25 : vector<8x1xf32> to vector<8x32xf32>
      %27 = arith.mulf %17, %26 : vector<8x32xf32>
      %c0_19 = arith.constant 0 : index
      %c0_20 = arith.constant 0 : index
      %28 = vector.load %arg3[%c0_19, %c0_20] : memref<1x32xf32, #tpu.memory_space<vmem>>, vector<1x32xf32>
      %29 = vector.broadcast %28 : vector<1x32xf32> to vector<8x32xf32>
      %30 = arith.mulf %27, %29 : vector<8x32xf32>
      %31 = arith.truncf %30 : vector<8x32xf32> to vector<8x32xbf16>
      %c0_21 = arith.constant 0 : index
      %c0_22 = arith.constant 0 : index
      %32 = vector.load %arg7[%c0_21, %c0_22] : memref<8x32xbf16, #tpu.memory_space<vmem>>, vector<8x32xbf16>
      tpu.vector_store %arg7[%c0_21, %c0_22], %31 {strides = array<i32>} : memref<8x32xbf16, #tpu.memory_space<vmem>>, vector<8x32xbf16>,
      %cst_23 = arith.constant 0.000000e+00 : f32
      %33 = vector.broadcast %cst_23 : f32 to vector<8x32xf32>
      %c0_24 = arith.constant 0 : index
      %c0_25 = arith.constant 0 : index
      %34 = vector.load %arg8[%c0_24, %c0_25] : memref<8x32xf32, #tpu.memory_space<vmem>>, vector<8x32xf32>
      tpu.vector_store %arg8[%c0_24, %c0_25], %33 {strides = array<i32>} : memref<8x32xf32, #tpu.memory_space<vmem>>, vector<8x32xf32>,
    } else {
    }
    %c0 = arith.constant 0 : index
    %c0_1 = arith.constant 0 : index
    %3 = vector.load %arg7[%c0, %c0_1] : memref<8x32xbf16, #tpu.memory_space<vmem>>, vector<8x32xbf16>
    %c0_2 = arith.constant 0 : index
    %c0_3 = arith.constant 0 : index
    %4 = vector.load %arg4[%c0_2, %c0_3] : memref<32x64xbf16, #tpu.memory_space<vmem>>, vector<32x64xbf16>
    %cst = arith.constant dense<0.000000e+00> : vector<8x64xf32>
    %5 = tpu.matmul %3, %4, %cst {dimension_numbers = #tpu.dot_dimension_numbers<[1], [0], [0], [1], [0, 0, 1, 1], [], []>} : vector<8x32xbf16>, vector<32x64xbf16>, vector<8x64xf32> -> vector<8x64xf32>
    %cst_4 = arith.constant 0.000000e+00 : f32
    %6 = vector.broadcast %cst_4 : f32 to vector<8x64xf32>
    %7 = arith.maximumf %5, %6 : vector<8x64xf32>
    %8 = arith.truncf %7 : vector<8x64xf32> to vector<8x64xbf16>
    %c0_5 = arith.constant 0 : index
    %c0_6 = arith.constant 0 : index
    %9 = vector.load %arg8[%c0_5, %c0_6] : memref<8x32xf32, #tpu.memory_space<vmem>>, vector<8x32xf32>
    %c0_7 = arith.constant 0 : index
    %c0_8 = arith.constant 0 : index
    %10 = vector.load %arg5[%c0_7, %c0_8] : memref<64x32xbf16, #tpu.memory_space<vmem>>, vector<64x32xbf16>
    %cst_9 = arith.constant dense<0.000000e+00> : vector<8x32xf32>
    %11 = tpu.matmul %8, %10, %cst_9 {dimension_numbers = #tpu.dot_dimension_numbers<[1], [0], [0], [1], [0, 0, 1, 1], [], []>} : vector<8x64xbf16>, vector<64x32xbf16>, vector<8x32xf32> -> vector<8x32xf32>
    %12 = arith.addf %9, %11 : vector<8x32xf32>
    %c0_10 = arith.constant 0 : index
    %c0_11 = arith.constant 0 : index
    %13 = vector.load %arg8[%c0_10, %c0_11] : memref<8x32xf32, #tpu.memory_space<vmem>>, vector<8x32xf32>
    tpu.vector_store %arg8[%c0_10, %c0_11], %12 {strides = array<i32>} : memref<8x32xf32, #tpu.memory_space<vmem>>, vector<8x32xf32>,
    %c0_i32_12 = arith.constant 0 : i32
    %14 = arith.cmpi eq, %arg1, %c0_i32_12 : i32
    %15 = arith.extui %14 : i1 to i32
    %c0_i32_13 = arith.constant 0 : i32
    %16 = arith.cmpi ne, %15, %c0_i32_13 : i32
    scf.if %16 {
      %c0_14 = arith.constant 0 : index
      %c0_15 = arith.constant 0 : index
      %17 = vector.load %arg2[%c0_14, %c0_15] : memref<8x32xf32, #tpu.memory_space<vmem>>, vector<8x32xf32>
      %c0_16 = arith.constant 0 : index
      %c0_17 = arith.constant 0 : index
      %18 = vector.load %arg8[%c0_16, %c0_17] : memref<8x32xf32, #tpu.memory_space<vmem>>, vector<8x32xf32>
      %19 = arith.addf %17, %18 : vector<8x32xf32>
      %c0_18 = arith.constant 0 : index
      %c0_19 = arith.constant 0 : index
      %20 = vector.load %arg6[%c0_18, %c0_19] : memref<8x32xf32, #tpu.memory_space<vmem>>, vector<8x32xf32>
      tpu.vector_store %arg6[%c0_18, %c0_19], %19 {strides = array<i32>} : memref<8x32xf32, #tpu.memory_space<vmem>>, vector<8x32xf32>,
    } else {
    }
    return
  }
  func.func @transform_0(%arg0: i32, %arg1: i32) -> (i32, i32) {
    %c0_i32 = arith.constant 0 : i32
    %c0_i32_0 = arith.constant 0 : i32
    return %arg0, %c0_i32 : i32, i32
  }
  func.func @transform_1(%arg0: i32, %arg1: i32) -> (i32, i32) {
    %c0_i32 = arith.constant 0 : i32
    %c0_i32_0 = arith.constant 0 : i32
    %c0_i32_1 = arith.constant 0 : i32
    return %c0_i32, %c0_i32_0 : i32, i32
  }
  func.func @transform_2(%arg0: i32, %arg1: i32) -> (i32, i32) {
    %c0_i32 = arith.constant 0 : i32
    %c0_i32_0 = arith.constant 0 : i32
    return %c0_i32, %arg1 : i32, i32
  }
  func.func @transform_3(%arg0: i32, %arg1: i32) -> (i32, i32) {
    %c0_i32 = arith.constant 0 : i32
    %c0_i32_0 = arith.constant 0 : i32
    return %arg1, %c0_i32 : i32, i32
  }
  func.func @transform_4(%arg0: i32, %arg1: i32) -> (i32, i32) {
    %c0_i32 = arith.constant 0 : i32
    %c0_i32_0 = arith.constant 0 : i32
    return %arg0, %c0_i32 : i32, i32
  }
}

</mosaic_0001>

<llo_original>
// kernel: tpu_custom_call.1
$region0: #{tpu_custom_call.1}
  #allocation0 [shape = 'u32[]', space=smem, size = 0x4, offset = 0x4, fixed_abs, tag = 'smem constant byte address 0x4 - core index']
  #allocation1 [shape = 'u32[144,128]{1,0:T(1,128)}', space=vmem, size = 0x12000, scoped, tag = 'internal scratch']
  #allocation2 [shape = 'bf16[8,32]{1,0:T(8,128)(2,1)}', space=vmem, size = 0x800, scoped, tag = 'scratch operand']
  #allocation3 [shape = 'f32[8,32]{1,0:T(8,128)}', space=vmem, size = 0x1000, scoped, tag = 'scratch operand']
  %s0 = inlined_call_operand.vmem [shape: f32[16,32], index: 0, kind: input, shape index: {}]
  %s1 = inlined_call_operand.vmem [shape: f32[1,32], index: 1, kind: input, shape index: {}]
  %s2 = inlined_call_operand.vmem [shape: bf16[32,64], index: 2, kind: input, shape index: {}]
  %s3 = inlined_call_operand.vmem [shape: bf16[64,32], index: 3, kind: input, shape index: {}]
  %s4 = inlined_call_operand.hbm [shape: f32[16,32], index: 4, kind: output, shape index: {}]
  %s5 = sld [smem:[#allocation0]]
  $region57: #{tpu_custom_call.1} parent=0
    _
  %s7 = ssub.s32 1, %s5
  %s8 = scalar_select 0, %s7, %s5
  $region1: #{tpu_custom_call.1} parent=0
    #allocation4 [shape = 'u8[8192]{0}', space=vmem, size = 0x2000, scoped, tag = 'output window, operand 0']
    #allocation5 [shape = 's32[2]{0}', space=sflag, size = 0x8, scoped, tag = 'scoped memory for tpu_custom_call.1']
    %9 = vsyncpa [#allocation5], 0
    %s10 = scalar_lea.sflag [#allocation5], 1
    %11 = vsyncpa %s10, 0
    loop: start=0, step=1, limit=4
    $region2: #{tpu_custom_call.1} parent=1 // loop_pre_header
      _
    $region3: #{tpu_custom_call.1} parent=1 // loop_header
      %s13 = sphi 0, %s17
      %p14 = scmp.ge.s32.totalorder %s13, 4
      %s20 = sphi 0, %s32
      %s21 = sphi 0, %s28
      %s22 = sphi 0, %s20
      %s23 = sphi 0, %s21
      %s24 = sphi 0, %s22
      %s25 = sphi 0, %s23
      %s35 = sphi 0, %s37
      %s38 = sphi 0, %s35
      %s39 = sphi 0, %s38
      %s55 = sphi 0, %s39
      %s59 = sphi 0, %s59
      %s61 = sphi 0, %s59
      %s62 = sphi 0, %s61
      %s76 = sphi 0, %s62
      %s82 = sphi 0, %s84
      %s85 = sphi 0, %s82
      %s86 = sphi 0, %s85
      %s102 = sphi 0, %s86
      %s108 = sphi 0, %s110
      %s111 = sphi 0, %s108
      %s112 = sphi 0, %s111
      %s128 = sphi 0, %s112
      %s134 = sphi 0, %s136
      %s137 = sphi 0, %s134
      %s138 = sphi 0, %s137
      %s154 = sphi 0, %s138
    $region4: #{tpu_custom_call.1} parent=1 // loop_header_branch
      %16 = sbr.rel (%p14) target = $region8
    $region5: #{tpu_custom_call.1} parent=1 // loop_body
      %s18 = ssub.s32 %s13, 1
      %s19 = ssub.s32 %s13, 2
      %s26 = sadd.s32 1, %s21
      %p27 = scmp.ge.s32.totalorder %s26, 1
      %s28 = scalar_select %p27, 0, %s26
      %s29 = sadd.s32 1, %s20
      %s30 = scalar_select %p27, %s29, %s20
      %p31 = scmp.ge.s32.totalorder %s30, 2
      %s32 = scalar_select %p31, 0, %s30
      %s33 = ssub.s32 %s20, %s32
      %p34 = scmp.eq.s32.totalorder %s33, 0
      %s36 = sadd.s32 %s35, 1
      %s37 = scalar_select %p34, %s35, %s36
      %p40 = pneg %p34
      %p41 = scmp.eq.s32.totalorder %s13, 1
      %p42 = por %p40, %p41
      %p43 = scmp.ne.s32.totalorder %s35, %s38
      %p44 = scmp.eq.s32.totalorder %s13, 0
      %p45 = por %p43, %p44
      %p46 = scmp.ne.s32.totalorder %s35, %s38
      %p47 = scmp.eq.s32.totalorder %s18, 1
      %p48 = por %p46, %p47
      %p49 = scmp.ne.s32.totalorder %s38, %s39
      %p50 = scmp.eq.s32.totalorder %s18, 0
      %p51 = por %p49, %p50
      %p52 = scmp.ne.s32.totalorder %s38, %s39
      %p53 = scmp.eq.s32.totalorder %s19, 1
      %p54 = por %p52, %p53
      %p56 = scmp.ne.s32.totalorder %s39, %s55
      %p57 = scmp.eq.s32.totalorder %s19, 0
      %p58 = por %p56, %p57
      %s60 = sadd.s32 %s59, 1
      %p63 = scmp.eq.s32.totalorder %s13, 1
      %p64 = scmp.ne.s32.totalorder %s59, %s61
      %p65 = scmp.eq.s32.totalorder %s13, 0
      %p66 = por %p64, %p65
      %p67 = scmp.ne.s32.totalorder %s59, %s61
      %p68 = scmp.eq.s32.totalorder %s18, 1
      %p69 = por %p67, %p68
      %p70 = scmp.ne.s32.totalorder %s61, %s62
      %p71 = scmp.eq.s32.totalorder %s18, 0
      %p72 = por %p70, %p71
      %p73 = scmp.ne.s32.totalorder %s61, %s62
      %p74 = scmp.eq.s32.totalorder %s19, 1
      %p75 = por %p73, %p74
      %p77 = scmp.ne.s32.totalorder %s62, %s76
      %p78 = scmp.eq.s32.totalorder %s19, 0
      %p79 = por %p77, %p78
      %s80 = ssub.s32 %s21, %s28
      %p81 = scmp.eq.s32.totalorder %s80, 0
      %s83 = sadd.s32 %s82, 1
      %s84 = scalar_select %p81, %s82, %s83
      %p87 = pneg %p81
      %p88 = scmp.eq.s32.totalorder %s13, 1
      %p89 = por %p87, %p88
      %p90 = scmp.ne.s32.totalorder %s82, %s85
      %p91 = scmp.eq.s32.totalorder %s13, 0
      %p92 = por %p90, %p91
      %p93 = scmp.ne.s32.totalorder %s82, %s85
      %p94 = scmp.eq.s32.totalorder %s18, 1
      %p95 = por %p93, %p94
      %p96 = scmp.ne.s32.totalorder %s85, %s86
      %p97 = scmp.eq.s32.totalorder %s18, 0
      %p98 = por %p96, %p97
      %p99 = scmp.ne.s32.totalorder %s85, %s86
      %p100 = scmp.eq.s32.totalorder %s19, 1
      %p101 = por %p99, %p100
      %p103 = scmp.ne.s32.totalorder %s86, %s102
      %p104 = scmp.eq.s32.totalorder %s19, 0
      %p105 = por %p103, %p104
      %s106 = ssub.s32 %s21, %s28
      %p107 = scmp.eq.s32.totalorder %s106, 0
      %s109 = sadd.s32 %s108, 1
      %s110 = scalar_select %p107, %s108, %s109
      %p113 = pneg %p107
      %p114 = scmp.eq.s32.totalorder %s13, 1
      %p115 = por %p113, %p114
      %p116 = scmp.ne.s32.totalorder %s108, %s111
      %p117 = scmp.eq.s32.totalorder %s13, 0
      %p118 = por %p116, %p117
      %p119 = scmp.ne.s32.totalorder %s108, %s111
      %p120 = scmp.eq.s32.totalorder %s18, 1
      %p121 = por %p119, %p120
      %p122 = scmp.ne.s32.totalorder %s111, %s112
      %p123 = scmp.eq.s32.totalorder %s18, 0
      %p124 = por %p122, %p123
      %p125 = scmp.ne.s32.totalorder %s111, %s112
      %p126 = scmp.eq.s32.totalorder %s19, 1
      %p127 = por %p125, %p126
      %p129 = scmp.ne.s32.totalorder %s112, %s128
      %p130 = scmp.eq.s32.totalorder %s19, 0
      %p131 = por %p129, %p130
      %s132 = ssub.s32 %s20, %s32
      %p133 = scmp.eq.s32.totalorder %s132, 0
      %s135 = sadd.s32 %s134, 1
      %s136 = scalar_select %p133, %s134, %s135
      %p139 = pneg %p133
      %p140 = scmp.eq.s32.totalorder %s13, 1
      %p141 = por %p139, %p140
      %p142 = scmp.ne.s32.totalorder %s134, %s137
      %p143 = scmp.eq.s32.totalorder %s13, 0
      %p144 = por %p142, %p143
      %p145 = scmp.ne.s32.totalorder %s134, %s137
      %p146 = scmp.eq.s32.totalorder %s18, 1
      %p147 = por %p145, %p146
      %p148 = scmp.ne.s32.totalorder %s137, %s138
      %p149 = scmp.eq.s32.totalorder %s18, 0
      %p150 = por %p148, %p149
      %p151 = scmp.ne.s32.totalorder %s137, %s138
      %p152 = scmp.eq.s32.totalorder %s19, 1
      %p153 = por %p151, %p152
      %p155 = scmp.ne.s32.totalorder %s138, %s154
      %p156 = scmp.eq.s32.totalorder %s19, 0
      %p157 = por %p155, %p156
      %p158 = scmp.le.s32.totalorder 1, %s13
      %p159 = scmp.lt.s32.totalorder %s13, 3
      %p160 = pnand %p158, %p159
      %p161 = pneg %p160
      // Predicated region
      $region9: #{tpu_custom_call.1} parent=5 // pred_check
        _
      $region10: #{tpu_custom_call.1} parent=5 // pred_check_branch
        %163 = sbr.rel (%p160) target = $region12
      $region11: #{tpu_custom_call.1} parent=5 // pred_region
        %s164 = ssub.s32 %s13, 1
        // Predicated region
        $region13: #{tpu_custom_call.1} parent=11 // pred_check
          %p165 = pneg %p72
        $region14: #{tpu_custom_call.1} parent=11 // pred_check_branch
          %167 = sbr.rel (%p165) target = $region16
        $region15: #{tpu_custom_call.1} parent=11 // pred_region
          _
        $region16: #{tpu_custom_call.1} parent=11 // pred_fallthru
          _
        // Predicated region
        $region17: #{tpu_custom_call.1} parent=11 // pred_check
          %p168 = pneg %p98
        $region18: #{tpu_custom_call.1} parent=11 // pred_check_branch
          %170 = sbr.rel (%p168) target = $region20
        $region19: #{tpu_custom_call.1} parent=11 // pred_region
          %p171 = scmp.lt.s32.totalorder %s23, 0
          %s172 = scalar_select %p171, %s23, 0
          %s173 = smul.addr %s172, 4
          %s174 = scalar_lea.vmem %s2, %s173
        $region20: #{tpu_custom_call.1} parent=11 // pred_fallthru
          _
        // Predicated region
        $region21: #{tpu_custom_call.1} parent=11 // pred_check
          %p175 = pneg %p124
        $region22: #{tpu_custom_call.1} parent=11 // pred_check_branch
          %177 = sbr.rel (%p175) target = $region24
        $region23: #{tpu_custom_call.1} parent=11 // pred_region
          %s178 = smul.u32 8, %s23
          %p179 = scmp.lt.s32.totalorder %s178, 7
          %s180 = scalar_select %p179, %s178, 7
          %s181 = smul.addr %s180, 4
          %s182 = scalar_lea.vmem %s3, %s181
          %s183 = smul.u32 8, %s23
        $region24: #{tpu_custom_call.1} parent=11 // pred_fallthru
          _
      $region12: #{tpu_custom_call.1} parent=5 // pred_fallthru
        _
      %p184 = scmp.lt.s32.totalorder %s13, 2
      // Predicated region
      $region25: #{tpu_custom_call.1} parent=5 // pred_check
        %p185 = pneg %p184
      $region26: #{tpu_custom_call.1} parent=5 // pred_check_branch
        %187 = sbr.rel (%p185) target = $region28
      $region27: #{tpu_custom_call.1} parent=5 // pred_region
        // Predicated region
        $region29: #{tpu_custom_call.1} parent=27 // pred_check
          %p188 = pneg %p45
        $region30: #{tpu_custom_call.1} parent=27 // pred_check_branch
          %190 = sbr.rel (%p188) target = $region32
        $region31: #{tpu_custom_call.1} parent=27 // pred_region
          %p191 = scmp.lt.s32.totalorder %s20, 1
          %s192 = scalar_select %p191, %s20, 1
          %s193 = smul.addr %s192, 8
          %s194 = scalar_lea.vmem %s0, %s193
        $region32: #{tpu_custom_call.1} parent=27 // pred_fallthru
          _
      $region28: #{tpu_custom_call.1} parent=5 // pred_fallthru
        _
      %p195 = scmp.le.s32.totalorder 1, %s13
      %p196 = scmp.lt.s32.totalorder %s13, 3
      %p197 = pnand %p195, %p196
      %p198 = pneg %p197
      // Predicated region
      $region33: #{tpu_custom_call.1} parent=5 // pred_check
        _
      $region34: #{tpu_custom_call.1} parent=5 // pred_check_branch
        %200 = sbr.rel (%p197) target = $region36
      $region35: #{tpu_custom_call.1} parent=5 // pred_region
        %s201 = ssub.s32 %s13, 1
        %p202 = scmp.lt.s32.totalorder %s22, 1
        %s203 = scalar_select %p202, %s22, 1
        %s204 = smul.addr %s203, 8
        %s205 = scalar_lea.vmem %s0, %s204
        %p206 = pneg %p51
        %p207 = pneg %p48
        %p208 = pneg %p72
        %p209 = pneg %p69
        %p210 = scmp.lt.s32.totalorder %s23, 0
        %s211 = scalar_select %p210, %s23, 0
        %s212 = smul.addr %s211, 4
        %s213 = scalar_lea.vmem %s2, %s212
        %p214 = pneg %p98
        %p215 = pneg %p95
        %s216 = smul.u32 8, %s23
        %p217 = scmp.lt.s32.totalorder %s216, 7
        %s218 = scalar_select %p217, %s216, 7
        %s219 = smul.addr %s218, 4
        %s220 = scalar_lea.vmem %s3, %s219
        %p221 = pneg %p124
        %p222 = pneg %p121
        %p223 = pneg %p150
        %p224 = pneg %p147
        %s225 = sand.u32 %s137, 1
        %s226 = scalar_lea.sflag [#allocation5], %s225
        %s227 = sand.u32 %s137, 1
        %s228 = smul.addr %s227, 8
        %s229 = scalar_lea.vmem [#allocation4], %s228
        %p230 = scmp.lt.s32.totalorder %s22, 1
        %s231 = scalar_select %p230, %s22, 1
        %s232 = smul.addr %s231, 8
        %s233 = scalar_lea.vmem %s0, %s232
        %p234 = scmp.lt.s32.totalorder %s23, 0
        %s235 = scalar_select %p234, %s23, 0
        %s236 = smul.addr %s235, 4
        %s237 = scalar_lea.vmem %s2, %s236
        %s238 = smul.u32 8, %s23
        %p239 = scmp.lt.s32.totalorder %s238, 7
        %s240 = scalar_select %p239, %s238, 7
        %s241 = smul.addr %s240, 4
        %s242 = scalar_lea.vmem %s3, %s241
        %s243 = smul.u32 8, %s23
        %p245 = scmp.eq.s32.totalorder %s23, 0
        // Predicated region
        $region37: #{tpu_custom_call.1} parent=35 // pred_check
          %p246 = pneg %p245
        $region38: #{tpu_custom_call.1} parent=35 // pred_check_branch
          %248 = sbr.rel (%p246) target = $region40
        $region39: #{tpu_custom_call.1} parent=35 // pred_region
          %v249 = vld [vmem:[%s233] sm:$0xff]
          %v250 = vmul.f32 %v249, %v249
          %vm251 = vcmask 261120
          %v252 = vsel %vm251, %v250, 0.0
          %253 = vadd.xlane.f32.xlu0 %v252
          %v254 = vpop.xlane.xlu0 %253
          %v255 = vrcp.pop 32.0
          %v256 = vmul.f32 %v254, %v255
          %v257 = vadd.f32 %v256, 1e-06
          %v258 = vrsqrt.pop %v257
          %v259 = vmul.f32 %v249, %v258
          %v260 = vld [vmem:[%s1] sm:$0x1]
          %v262 = vlaneseq
          %v263 = vshrl.u32 %v262, 7
          %v264 = vsub.s32 0, %v263
          %v265 = vrot.slane %v260, %v264
          %v267 = vmul.f32 %v259, %v265
          %v268 = vpack.c.bf16 %v267, %v267
          %vm269 = vcmask 257024
          %270 = vst.msk [vmem:[#allocation2] sm:$0xf] %vm269, %v268
          %271 = vst.msk [vmem:[#allocation3] sm:$0xff] %vm251, 0.0
        $region40: #{tpu_custom_call.1} parent=35 // pred_fallthru
          _
        %v272 = vld [vmem:[#allocation2] sm:$0xf]
        %v273 = vld [vmem:[%s237] sm:$0xf]
        %v274 = vld [vmem:[%s237 + $0x4] sm:$0xf]
        %v275 = vld [vmem:[%s237 + $0x8] sm:$0xf]
        %v276 = vld [vmem:[%s237 + $0xc] sm:$0xf]
        %v281 = vunpack.c.l.b16 %v273
        %v282 = vunpack.c.l.b16 %v274
        %v283 = vunpack.c.l.b16 %v275
        %v284 = vunpack.c.l.b16 %v276
        %v285 = vpack.c.b16 %v282, %v281
        %v286 = vpack.c.b16 %v284, %v283
        %vm289 = vcmask 261120
        %v291 = vsel %vm289, %v272, 0
        %293 = vmatprep.subr.bf16.mxu0 0
        %294 = vmatpush1.bf16.msra.mxu0 %v285
        %295 = vmatprep.subr.bf16.mxu0 0
        %296 = vmatpush1.bf16.msra.mxu0 %v286
        %297 = vmatprep.subr.bf16.mxu0 0
        %298 = vmatpush1.bf16.msra.mxu0 0
        %299 = vmatprep.subr.bf16.mxu0 0
        %300 = vmatpush1.bf16.msra.mxu0 0
        %301 = vmatprep.subr.bf16.mxu0 0
        %302 = vmatpush1.bf16.msra.mxu0 0
        %303 = vmatprep.subr.bf16.mxu0 0
        %304 = vmatpush1.bf16.msra.mxu0 0
        %305 = vmatprep.subr.bf16.mxu0 0
        %306 = vmatpush1.bf16.msra.mxu0 0
        %307 = vmatprep.subr.bf16.mxu0 0
        %308 = vmatpush1.bf16.msra.mxu0 0
        %309 = vmatprep.subr.bf16.mxu0 0
        %310 = vmatpush1.bf16.msra.mxu0 0
        %311 = vmatprep.subr.bf16.mxu0 0
        %312 = vmatpush1.bf16.msra.mxu0 0
        %313 = vmatprep.subr.bf16.mxu0 0
        %314 = vmatpush1.bf16.msra.mxu0 0
        %315 = vmatprep.subr.bf16.mxu0 0
        %316 = vmatpush1.bf16.msra.mxu0 0
        %317 = vmatprep.subr.bf16.mxu0 0
        %318 = vmatpush1.bf16.msra.mxu0 0
        %319 = vmatprep.subr.bf16.mxu0 0
        %320 = vmatpush1.bf16.msra.mxu0 0
        %321 = vmatprep.subr.bf16.mxu0 0
        %322 = vmatpush1.bf16.msra.mxu0 0
        %323 = vmatprep.subr.bf16.mxu0 0
        %324 = vmatpush1.bf16.msra.mxu0 0
        %325 = vmatprep.mubr.bf16.mxu0 0
        %326 = vmatmul.mubr.bf16.gmra.mrb[0].mxu0 %v291
        %v327 = vpop.f32.mrb[0].mxu0
        %v328 = vadd.f32 0.0, %v327
        %v329 = vpop.f32.mrb[0].mxu0
        %v330 = vpop.f32.mrb[0].mxu0
        %v331 = vpop.f32.mrb[0].mxu0
        %332 = vdwg.mxu0
        %v333 = vmax.f32 %v328, 0.0
        %v334 = vpack.c.bf16 %v333, %v333
        %v335 = vld [vmem:[#allocation3] sm:$0xff]
        %v336 = vld [vmem:[%s242] sm:$0xf]
        %v337 = vld [vmem:[%s242 + $0x4] sm:$0xf]
        %v338 = vld [vmem:[%s242 + $0x8] sm:$0xf]
        %v339 = vld [vmem:[%s242 + $0xc] sm:$0xf]
        %v340 = vld [vmem:[%s242 + $0x10] sm:$0xf]
        %v341 = vld [vmem:[%s242 + $0x14] sm:$0xf]
        %v342 = vld [vmem:[%s242 + $0x18] sm:$0xf]
        %v343 = vld [vmem:[%s242 + $0x1c] sm:$0xf]
        %v352 = vunpack.c.l.b16 %v336
        %v353 = vunpack.c.l.b16 %v337
        %v354 = vunpack.c.l.b16 %v338
        %v355 = vunpack.c.l.b16 %v339
        %v356 = vunpack.c.l.b16 %v340
        %v357 = vunpack.c.l.b16 %v341
        %v358 = vunpack.c.l.b16 %v342
        %v359 = vunpack.c.l.b16 %v343
        %v360 = vpack.c.b16 %v353, %v352
        %v361 = vpack.c.b16 %v355, %v354
        %v362 = vpack.c.b16 %v357, %v356
        %v363 = vpack.c.b16 %v359, %v358
        %vm368 = vcmask 523264
        %v370 = vsel %vm368, %v334, 0
        %372 = vmatprep.subr.bf16.mxu0 0
        %373 = vmatpush1.bf16.msra.mxu0 %v360
        %374 = vmatprep.subr.bf16.mxu0 0
        %375 = vmatpush1.bf16.msra.mxu0 %v361
        %376 = vmatprep.subr.bf16.mxu0 0
        %377 = vmatpush1.bf16.msra.mxu0 %v362
        %378 = vmatprep.subr.bf16.mxu0 0
        %379 = vmatpush1.bf16.msra.mxu0 %v363
        %380 = vmatprep.subr.bf16.mxu0 0
        %381 = vmatpush1.bf16.msra.mxu0 0
        %382 = vmatprep.subr.bf16.mxu0 0
        %383 = vmatpush1.bf16.msra.mxu0 0
        %384 = vmatprep.subr.bf16.mxu0 0
        %385 = vmatpush1.bf16.msra.mxu0 0
        %386 = vmatprep.subr.bf16.mxu0 0
        %387 = vmatpush1.bf16.msra.mxu0 0
        %388 = vmatprep.subr.bf16.mxu0 0
        %389 = vmatpush1.bf16.msra.mxu0 0
        %390 = vmatprep.subr.bf16.mxu0 0
        %391 = vmatpush1.bf16.msra.mxu0 0
        %392 = vmatprep.subr.bf16.mxu0 0
        %393 = vmatpush1.bf16.msra.mxu0 0
        %394 = vmatprep.subr.bf16.mxu0 0
        %395 = vmatpush1.bf16.msra.mxu0 0
        %396 = vmatprep.subr.bf16.mxu0 0
        %397 = vmatpush1.bf16.msra.mxu0 0
        %398 = vmatprep.subr.bf16.mxu0 0
        %399 = vmatpush1.bf16.msra.mxu0 0
        %400 = vmatprep.subr.bf16.mxu0 0
        %401 = vmatpush1.bf16.msra.mxu0 0
        %402 = vmatprep.subr.bf16.mxu0 0
        %403 = vmatpush1.bf16.msra.mxu0 0
        %404 = vmatprep.mubr.bf16.mxu0 0
        %405 = vmatmul.mubr.bf16.gmra.mrb[0].mxu0 %v370
        %v406 = vpop.f32.mrb[0].mxu0
        %v407 = vadd.f32 0.0, %v406
        %v408 = vpop.f32.mrb[0].mxu0
        %v409 = vpop.f32.mrb[0].mxu0
        %v410 = vpop.f32.mrb[0].mxu0
        %411 = vdwg.mxu0
        %v412 = vadd.f32 %v335, %v407
        %413 = vst.msk [vmem:[#allocation3] sm:$0xff] %vm289, %v412
        // Predicated region
        $region41: #{tpu_custom_call.1} parent=35 // pred_check
          %p414 = pneg %p245
        $region42: #{tpu_custom_call.1} parent=35 // pred_check_branch
          %416 = sbr.rel (%p414) target = $region44
        $region43: #{tpu_custom_call.1} parent=35 // pred_region
          %v417 = vld [vmem:[%s233] sm:$0xff]
          %v418 = vld [vmem:[#allocation3] sm:$0xff]
          %v419 = vadd.f32 %v417, %v418
          %420 = vst.msk [vmem:[%s229] sm:$0xff] %vm289, %v419
        $region44: #{tpu_custom_call.1} parent=35 // pred_fallthru
          _
        %s421 = sand.u32 %s137, 1
        %s422 = scalar_lea.sflag [#allocation5], %s421
        %s423 = sand.u32 %s137, 1
        %s424 = smul.addr %s423, 8
        %s425 = scalar_lea.vmem [#allocation4], %s424
        // Predicated region
        $region45: #{tpu_custom_call.1} parent=35 // pred_check
          %p426 = pneg %p147
        $region46: #{tpu_custom_call.1} parent=35 // pred_check_branch
          %428 = sbr.rel (%p426) target = $region48
        $region47: #{tpu_custom_call.1} parent=35 // pred_region
          %s430 = ssub.s32 128, 128
          %431 = vsyncadd %s422, %s430
          %s432 = smul.addr %s22, 128
          %s433 = scalar_lea.hbm %s4, %s432
          %s435 = sshll.u32 %s425, 4
          %s436 = int_to_ptr.vmem [resolvable:$true] %s435
          %438 = dma.vmem_to_hbm [thread:$0]  %s436, 128, %s433, %s422
        $region48: #{tpu_custom_call.1} parent=35 // pred_fallthru
          _
      $region36: #{tpu_custom_call.1} parent=5 // pred_fallthru
        _
      %p439 = scmp.le.s32.totalorder 2, %s13
      // Predicated region
      $region49: #{tpu_custom_call.1} parent=5 // pred_check
        %p440 = pneg %p439
      $region50: #{tpu_custom_call.1} parent=5 // pred_check_branch
        %442 = sbr.rel (%p440) target = $region52
      $region51: #{tpu_custom_call.1} parent=5 // pred_region
        %s443 = ssub.s32 %s13, 2
        // Predicated region
        $region53: #{tpu_custom_call.1} parent=51 // pred_check
          %p444 = pneg %p153
        $region54: #{tpu_custom_call.1} parent=51 // pred_check_branch
          %446 = sbr.rel (%p444) target = $region56
        $region55: #{tpu_custom_call.1} parent=51 // pred_region
          %s447 = sand.u32 %s138, 1
          %s448 = scalar_lea.sflag [#allocation5], %s447
          %s449 = sand.u32 %s138, 1
          %s450 = smul.addr %s449, 8
          %s451 = scalar_lea.vmem [#allocation4], %s450
          %452 = dma.done %s448, 128
        $region56: #{tpu_custom_call.1} parent=51 // pred_fallthru
          _
      $region52: #{tpu_custom_call.1} parent=5 // pred_fallthru
        _
    $region6: #{tpu_custom_call.1} parent=1 // loop_footer
      %s17 = sadd.s32 1, %s13
    $region7: #{tpu_custom_call.1} parent=1 // loop_footer_branch
      %12 = sbr.rel target = $region3
    $region8: #{tpu_custom_call.1} parent=1 // loop_exit
      _
    %453 = vsyncpa [#allocation5], 1
    %s454 = scalar_lea.sflag [#allocation5], 1
    %455 = vsyncpa %s454, 1

// kernel: tpu_custom_call.1
$region0: #{tpu_custom_call.1}
  #allocation0 [shape = 'u32[]', space=smem, size = 0x4, offset = 0x4, fixed_abs, tag = 'smem constant byte address 0x4 - core index']
  #allocation1 [shape = 'u32[144,128]{1,0:T(1,128)}', space=vmem, size = 0x12000, scoped, tag = 'internal scratch']
  #allocation2 [shape = 'bf16[8,32]{1,0:T(8,128)(2,1)}', space=vmem, size = 0x800, scoped, tag = 'scratch operand']
  #allocation3 [shape = 'f32[8,32]{1,0:T(8,128)}', space=vmem, size = 0x1000, scoped, tag = 'scratch operand']
  %s0 = inlined_call_operand.vmem [shape: f32[16,32], index: 0, kind: input, shape index: {}]
  %s1 = inlined_call_operand.vmem [shape: f32[1,32], index: 1, kind: input, shape index: {}]
  %s2 = inlined_call_operand.vmem [shape: bf16[32,64], index: 2, kind: input, shape index: {}]
  %s3 = inlined_call_operand.vmem [shape: bf16[64,32], index: 3, kind: input, shape index: {}]
  %s4 = inlined_call_operand.hbm [shape: f32[16,32], index: 4, kind: output, shape index: {}]
  %s5 = sld [smem:[#allocation0]]
  $region57: #{tpu_custom_call.1} parent=0
    _
  %s7 = ssub.s32 1, %s5
  %s8 = scalar_select 0, %s7, %s5
  $region1: #{tpu_custom_call.1} parent=0
    #allocation4 [shape = 'u8[8192]{0}', space=vmem, size = 0x2000, scoped, tag = 'output window, operand 0']
    #allocation5 [shape = 's32[2]{0}', space=sflag, size = 0x8, scoped, tag = 'scoped memory for tpu_custom_call.1']
    %9 = vsyncpa [#allocation5], 0
    %s10 = scalar_lea.sflag [#allocation5], 1
    %11 = vsyncpa %s10, 0
    loop: start=0, step=1, limit=4
    $region2: #{tpu_custom_call.1} parent=1 // loop_pre_header
      _
    $region3: #{tpu_custom_call.1} parent=1 // loop_header
      %s13 = sphi 0, %s17
      %p14 = scmp.ge.s32.totalorder %s13, 4
      %s20 = sphi 0, %s32
      %s21 = sphi 0, %s28
      %s22 = sphi 0, %s20
      %s23 = sphi 0, %s21
      %s24 = sphi 0, %s22
      %s25 = sphi 0, %s23
      %s35 = sphi 0, %s37
      %s38 = sphi 0, %s35
      %s39 = sphi 0, %s38
      %s55 = sphi 0, %s39
      %s59 = sphi 0, %s59
      %s61 = sphi 0, %s59
      %s62 = sphi 0, %s61
      %s76 = sphi 0, %s62
      %s82 = sphi 0, %s84
      %s85 = sphi 0, %s82
      %s86 = sphi 0, %s85
      %s102 = sphi 0, %s86
      %s108 = sphi 0, %s110
      %s111 = sphi 0, %s108
      %s112 = sphi 0, %s111
      %s128 = sphi 0, %s112
      %s134 = sphi 0, %s136
      %s137 = sphi 0, %s134
      %s138 = sphi 0, %s137
      %s154 = sphi 0, %s138
    $region4: #{tpu_custom_call.1} parent=1 // loop_header_branch
      %16 = sbr.rel (%p14) target = $region8
    $region5: #{tpu_custom_call.1} parent=1 // loop_body
      %s18 = ssub.s32 %s13, 1
      %s19 = ssub.s32 %s13, 2
      %s26 = sadd.s32 1, %s21
      %p27 = scmp.ge.s32.totalorder %s26, 1
      %s28 = scalar_select %p27, 0, %s26
      %s29 = sadd.s32 1, %s20
      %s30 = scalar_select %p27, %s29, %s20
      %p31 = scmp.ge.s32.totalorder %s30, 2
      %s32 = scalar_select %p31, 0, %s30
      %s33 = ssub.s32 %s20, %s32
      %p34 = scmp.eq.s32.totalorder %s33, 0
      %s36 = sadd.s32 %s35, 1
      %s37 = scalar_select %p34, %s35, %s36
      %p40 = pneg %p34
      %p41 = scmp.eq.s32.totalorder %s13, 1
      %p42 = por %p40, %p41
      %p43 = scmp.ne.s32.totalorder %s35, %s38
      %p44 = scmp.eq.s32.totalorder %s13, 0
      %p45 = por %p43, %p44
      %p46 = scmp.ne.s32.totalorder %s35, %s38
      %p47 = scmp.eq.s32.totalorder %s18, 1
      %p48 = por %p46, %p47
      %p49 = scmp.ne.s32.totalorder %s38, %s39
      %p50 = scmp.eq.s32.totalorder %s18, 0
      %p51 = por %p49, %p50
      %p52 = scmp.ne.s32.totalorder %s38, %s39
      %p53 = scmp.eq.s32.totalorder %s19, 1
      %p54 = por %p52, %p53
      %p56 = scmp.ne.s32.totalorder %s39, %s55
      %p57 = scmp.eq.s32.totalorder %s19, 0
      %p58 = por %p56, %p57
      %s60 = sadd.s32 %s59, 1
      %p63 = scmp.eq.s32.totalorder %s13, 1
      %p64 = scmp.ne.s32.totalorder %s59, %s61
      %p65 = scmp.eq.s32.totalorder %s13, 0
      %p66 = por %p64, %p65
      %p67 = scmp.ne.s32.totalorder %s59, %s61
      %p68 = scmp.eq.s32.totalorder %s18, 1
      %p69 = por %p67, %p68
      %p70 = scmp.ne.s32.totalorder %s61, %s62
      %p71 = scmp.eq.s32.totalorder %s18, 0
      %p72 = por %p70, %p71
      %p73 = scmp.ne.s32.totalorder %s61, %s62
      %p74 = scmp.eq.s32.totalorder %s19, 1
      %p75 = por %p73, %p74
      %p77 = scmp.ne.s32.totalorder %s62, %s76
      %p78 = scmp.eq.s32.totalorder %s19, 0
      %p79 = por %p77, %p78
      %s80 = ssub.s32 %s21, %s28
      %p81 = scmp.eq.s32.totalorder %s80, 0
      %s83 = sadd.s32 %s82, 1
      %s84 = scalar_select %p81, %s82, %s83
      %p87 = pneg %p81
      %p88 = scmp.eq.s32.totalorder %s13, 1
      %p89 = por %p87, %p88
      %p90 = scmp.ne.s32.totalorder %s82, %s85
      %p91 = scmp.eq.s32.totalorder %s13, 0
      %p92 = por %p90, %p91
      %p93 = scmp.ne.s32.totalorder %s82, %s85
      %p94 = scmp.eq.s32.totalorder %s18, 1
      %p95 = por %p93, %p94
      %p96 = scmp.ne.s32.totalorder %s85, %s86
      %p97 = scmp.eq.s32.totalorder %s18, 0
      %p98 = por %p96, %p97
      %p99 = scmp.ne.s32.totalorder %s85, %s86
      %p100 = scmp.eq.s32.totalorder %s19, 1
      %p101 = por %p99, %p100
      %p103 = scmp.ne.s32.totalorder %s86, %s102
      %p104 = scmp.eq.s32.totalorder %s19, 0
      %p105 = por %p103, %p104
      %s106 = ssub.s32 %s21, %s28
      %p107 = scmp.eq.s32.totalorder %s106, 0
      %s109 = sadd.s32 %s108, 1
      %s110 = scalar_select %p107, %s108, %s109
      %p113 = pneg %p107
      %p114 = scmp.eq.s32.totalorder %s13, 1
      %p115 = por %p113, %p114
      %p116 = scmp.ne.s32.totalorder %s108, %s111
      %p117 = scmp.eq.s32.totalorder %s13, 0
      %p118 = por %p116, %p117
      %p119 = scmp.ne.s32.totalorder %s108, %s111
      %p120 = scmp.eq.s32.totalorder %s18, 1
      %p121 = por %p119, %p120
      %p122 = scmp.ne.s32.totalorder %s111, %s112
      %p123 = scmp.eq.s32.totalorder %s18, 0
      %p124 = por %p122, %p123
      %p125 = scmp.ne.s32.totalorder %s111, %s112
      %p126 = scmp.eq.s32.totalorder %s19, 1
      %p127 = por %p125, %p126
      %p129 = scmp.ne.s32.totalorder %s112, %s128
      %p130 = scmp.eq.s32.totalorder %s19, 0
      %p131 = por %p129, %p130
      %s132 = ssub.s32 %s20, %s32
      %p133 = scmp.eq.s32.totalorder %s132, 0
      %s135 = sadd.s32 %s134, 1
      %s136 = scalar_select %p133, %s134, %s135
      %p139 = pneg %p133
      %p140 = scmp.eq.s32.totalorder %s13, 1
      %p141 = por %p139, %p140
      %p142 = scmp.ne.s32.totalorder %s134, %s137
      %p143 = scmp.eq.s32.totalorder %s13, 0
      %p144 = por %p142, %p143
      %p145 = scmp.ne.s32.totalorder %s134, %s137
      %p146 = scmp.eq.s32.totalorder %s18, 1
      %p147 = por %p145, %p146
      %p148 = scmp.ne.s32.totalorder %s137, %s138
      %p149 = scmp.eq.s32.totalorder %s18, 0
      %p150 = por %p148, %p149
      %p151 = scmp.ne.s32.totalorder %s137, %s138
      %p152 = scmp.eq.s32.totalorder %s19, 1
      %p153 = por %p151, %p152
      %p155 = scmp.ne.s32.totalorder %s138, %s154
      %p156 = scmp.eq.s32.totalorder %s19, 0
      %p157 = por %p155, %p156
      %p158 = scmp.le.s32.totalorder 1, %s13
      %p159 = scmp.lt.s32.totalorder %s13, 3
      %p160 = pnand %p158, %p159
      %p161 = pneg %p160
      // Predicated region
      $region9: #{tpu_custom_call.1} parent=5 // pred_check
        _
      $region10: #{tpu_custom_call.1} parent=5 // pred_check_branch
        %163 = sbr.rel (%p160) target = $region12
      $region11: #{tpu_custom_call.1} parent=5 // pred_region
        %s164 = ssub.s32 %s13, 1
        // Predicated region
        $region13: #{tpu_custom_call.1} parent=11 // pred_check
          %p165 = pneg %p72
        $region14: #{tpu_custom_call.1} parent=11 // pred_check_branch
          %167 = sbr.rel (%p165) target = $region16
        $region15: #{tpu_custom_call.1} parent=11 // pred_region
          _
        $region16: #{tpu_custom_call.1} parent=11 // pred_fallthru
          _
        // Predicated region
        $region17: #{tpu_custom_call.1} parent=11 // pred_check
          %p168 = pneg %p98
        $region18: #{tpu_custom_call.1} parent=11 // pred_check_branch
          %170 = sbr.rel (%p168) target = $region20
        $region19: #{tpu_custom_call.1} parent=11 // pred_region
          %p171 = scmp.lt.s32.totalorder %s23, 0
          %s172 = scalar_select %p171, %s23, 0
          %s173 = smul.addr %s172, 4
          %s174 = scalar_lea.vmem %s2, %s173
        $region20: #{tpu_custom_call.1} parent=11 // pred_fallthru
          _
        // Predicated region
        $region21: #{tpu_custom_call.1} parent=11 // pred_check
          %p175 = pneg %p124
        $region22: #{tpu_custom_call.1} parent=11 // pred_check_branch
          %177 = sbr.rel (%p175) target = $region24
        $region23: #{tpu_custom_call.1} parent=11 // pred_region
          %s178 = smul.u32 8, %s23
          %p179 = scmp.lt.s32.totalorder %s178, 7
          %s180 = scalar_select %p179, %s178, 7
          %s181 = smul.addr %s180, 4
          %s182 = scalar_lea.vmem %s3, %s181
          %s183 = smul.u32 8, %s23
        $region24: #{tpu_custom_call.1} parent=11 // pred_fallthru
          _
      $region12: #{tpu_custom_call.1} parent=5 // pred_fallthru
        _
      %p184 = scmp.lt.s32.totalorder %s13, 2
      // Predicated region
      $region25: #{tpu_custom_call.1} parent=5 // pred_check
        %p185 = pneg %p184
      $region26: #{tpu_custom_call.1} parent=5 // pred_check_branch
        %187 = sbr.rel (%p185) target = $region28
      $region27: #{tpu_custom_call.1} parent=5 // pred_region
        // Predicated region
        $region29: #{tpu_custom_call.1} parent=27 // pred_check
          %p188 = pneg %p45
        $region30: #{tpu_custom_call.1} parent=27 // pred_check_branch
          %190 = sbr.rel (%p188) target = $region32
        $region31: #{tpu_custom_call.1} parent=27 // pred_region
          %p191 = scmp.lt.s32.totalorder %s20, 1
          %s192 = scalar_select %p191, %s20, 1
          %s193 = smul.addr %s192, 8
          %s194 = scalar_lea.vmem %s0, %s193
        $region32: #{tpu_custom_call.1} parent=27 // pred_fallthru
          _
      $region28: #{tpu_custom_call.1} parent=5 // pred_fallthru
        _
      %p195 = scmp.le.s32.totalorder 1, %s13
      %p196 = scmp.lt.s32.totalorder %s13, 3
      %p197 = pnand %p195, %p196
      %p198 = pneg %p197
      // Predicated region
      $region33: #{tpu_custom_call.1} parent=5 // pred_check
        _
      $region34: #{tpu_custom_call.1} parent=5 // pred_check_branch
        %200 = sbr.rel (%p197) target = $region36
      $region35: #{tpu_custom_call.1} parent=5 // pred_region
        %s201 = ssub.s32 %s13, 1
        %p202 = scmp.lt.s32.totalorder %s22, 1
        %s203 = scalar_select %p202, %s22, 1
        %s204 = smul.addr %s203, 8
        %s205 = scalar_lea.vmem %s0, %s204
        %p206 = pneg %p51
        %p207 = pneg %p48
        %p208 = pneg %p72
        %p209 = pneg %p69
        %p210 = scmp.lt.s32.totalorder %s23, 0
        %s211 = scalar_select %p210, %s23, 0
        %s212 = smul.addr %s211, 4
        %s213 = scalar_lea.vmem %s2, %s212
        %p214 = pneg %p98
        %p215 = pneg %p95
        %s216 = smul.u32 8, %s23
        %p217 = scmp.lt.s32.totalorder %s216, 7
        %s218 = scalar_select %p217, %s216, 7
        %s219 = smul.addr %s218, 4
        %s220 = scalar_lea.vmem %s3, %s219
        %p221 = pneg %p124
        %p222 = pneg %p121
        %p223 = pneg %p150
        %p224 = pneg %p147
        %s225 = sand.u32 %s137, 1
        %s226 = scalar_lea.sflag [#allocation5], %s225
        %s227 = sand.u32 %s137, 1
        %s228 = smul.addr %s227, 8
        %s229 = scalar_lea.vmem [#allocation4], %s228
        %p230 = scmp.lt.s32.totalorder %s22, 1
        %s231 = scalar_select %p230, %s22, 1
        %s232 = smul.addr %s231, 8
        %s233 = scalar_lea.vmem %s0, %s232
        %p234 = scmp.lt.s32.totalorder %s23, 0
        %s235 = scalar_select %p234, %s23, 0
        %s236 = smul.addr %s235, 4
        %s237 = scalar_lea.vmem %s2, %s236
        %s238 = smul.u32 8, %s23
        %p239 = scmp.lt.s32.totalorder %s238, 7
        %s240 = scalar_select %p239, %s238, 7
        %s241 = smul.addr %s240, 4
        %s242 = scalar_lea.vmem %s3, %s241
        %s243 = smul.u32 8, %s23
        %p245 = scmp.eq.s32.totalorder %s23, 0
        // Predicated region
        $region37: #{tpu_custom_call.1} parent=35 // pred_check
          %p246 = pneg %p245
        $region38: #{tpu_custom_call.1} parent=35 // pred_check_branch
          %248 = sbr.rel (%p246) target = $region40
        $region39: #{tpu_custom_call.1} parent=35 // pred_region
          %v249 = vld [vmem:[%s233] sm:$0xff]
          %v250 = vmul.f32 %v249, %v249
          %vm251 = vcmask 261120
          %v252 = vsel %vm251, %v250, 0.0
          %253 = vadd.xlane.f32.xlu0 %v252
          %v254 = vpop.xlane.xlu0 %253
          %v255 = vrcp.pop 32.0
          %v256 = vmul.f32 %v254, %v255
          %v257 = vadd.f32 %v256, 1e-06
          %v258 = vrsqrt.pop %v257
          %v259 = vmul.f32 %v249, %v258
          %v260 = vld [vmem:[%s1] sm:$0x1]
          %v262 = vlaneseq
          %v263 = vshrl.u32 %v262, 7
          %v264 = vsub.s32 0, %v263
          %v265 = vrot.slane %v260, %v264
          %v267 = vmul.f32 %v259, %v265
          %v268 = vpack.c.bf16 %v267, %v267
          %vm269 = vcmask 257024
          %270 = vst.msk [vmem:[#allocation2] sm:$0xf] %vm269, %v268
          %271 = vst.msk [vmem:[#allocation3] sm:$0xff] %vm251, 0.0
        $region40: #{tpu_custom_call.1} parent=35 // pred_fallthru
          _
        %v272 = vld [vmem:[#allocation2] sm:$0xf]
        %v273 = vld [vmem:[%s237] sm:$0xf]
        %v274 = vld [vmem:[%s237 + $0x4] sm:$0xf]
        %v275 = vld [vmem:[%s237 + $0x8] sm:$0xf]
        %v276 = vld [vmem:[%s237 + $0xc] sm:$0xf]
        %v281 = vunpack.c.l.b16 %v273
        %v282 = vunpack.c.l.b16 %v274
        %v283 = vunpack.c.l.b16 %v275
        %v284 = vunpack.c.l.b16 %v276
        %v285 = vpack.c.b16 %v282, %v281
        %v286 = vpack.c.b16 %v284, %v283
        %vm289 = vcmask 261120
        %v291 = vsel %vm289, %v272, 0
        %293 = vmatprep.subr.bf16.mxu0 0
        %294 = vmatpush1.bf16.msra.mxu0 %v285
        %295 = vmatprep.subr.bf16.mxu0 0
        %296 = vmatpush1.bf16.msra.mxu0 %v286
        %297 = vmatprep.subr.bf16.mxu0 0
        %298 = vmatpush1.bf16.msra.mxu0 0
        %299 = vmatprep.subr.bf16.mxu0 0
        %300 = vmatpush1.bf16.msra.mxu0 0
        %301 = vmatprep.subr.bf16.mxu0 0
        %302 = vmatpush1.bf16.msra.mxu0 0
        %303 = vmatprep.subr.bf16.mxu0 0
        %304 = vmatpush1.bf16.msra.mxu0 0
        %305 = vmatprep.subr.bf16.mxu0 0
        %306 = vmatpush1.bf16.msra.mxu0 0
        %307 = vmatprep.subr.bf16.mxu0 0
        %308 = vmatpush1.bf16.msra.mxu0 0
        %309 = vmatprep.subr.bf16.mxu0 0
        %310 = vmatpush1.bf16.msra.mxu0 0
        %311 = vmatprep.subr.bf16.mxu0 0
        %312 = vmatpush1.bf16.msra.mxu0 0
        %313 = vmatprep.subr.bf16.mxu0 0
        %314 = vmatpush1.bf16.msra.mxu0 0
        %315 = vmatprep.subr.bf16.mxu0 0
        %316 = vmatpush1.bf16.msra.mxu0 0
        %317 = vmatprep.subr.bf16.mxu0 0
        %318 = vmatpush1.bf16.msra.mxu0 0
        %319 = vmatprep.subr.bf16.mxu0 0
        %320 = vmatpush1.bf16.msra.mxu0 0
        %321 = vmatprep.subr.bf16.mxu0 0
        %322 = vmatpush1.bf16.msra.mxu0 0
        %323 = vmatprep.subr.bf16.mxu0 0
        %324 = vmatpush1.bf16.msra.mxu0 0
        %325 = vmatprep.mubr.bf16.mxu0 0
        %326 = vmatmul.mubr.bf16.gmra.mrb[0].mxu0 %v291
        %v327 = vpop.f32.mrb[0].mxu0
        %v328 = vadd.f32 0.0, %v327
        %v329 = vpop.f32.mrb[0].mxu0
        %v330 = vpop.f32.mrb[0].mxu0
        %v331 = vpop.f32.mrb[0].mxu0
        %332 = vdwg.mxu0
        %v333 = vmax.f32 %v328, 0.0
        %v334 = vpack.c.bf16 %v333, %v333
        %v335 = vld [vmem:[#allocation3] sm:$0xff]
        %v336 = vld [vmem:[%s242] sm:$0xf]
        %v337 = vld [vmem:[%s242 + $0x4] sm:$0xf]
        %v338 = vld [vmem:[%s242 + $0x8] sm:$0xf]
        %v339 = vld [vmem:[%s242 + $0xc] sm:$0xf]
        %v340 = vld [vmem:[%s242 + $0x10] sm:$0xf]
        %v341 = vld [vmem:[%s242 + $0x14] sm:$0xf]
        %v342 = vld [vmem:[%s242 + $0x18] sm:$0xf]
        %v343 = vld [vmem:[%s242 + $0x1c] sm:$0xf]
        %v352 = vunpack.c.l.b16 %v336
        %v353 = vunpack.c.l.b16 %v337
        %v354 = vunpack.c.l.b16 %v338
        %v355 = vunpack.c.l.b16 %v339
        %v356 = vunpack.c.l.b16 %v340
        %v357 = vunpack.c.l.b16 %v341
        %v358 = vunpack.c.l.b16 %v342
        %v359 = vunpack.c.l.b16 %v343
        %v360 = vpack.c.b16 %v353, %v352
        %v361 = vpack.c.b16 %v355, %v354
        %v362 = vpack.c.b16 %v357, %v356
        %v363 = vpack.c.b16 %v359, %v358
        %vm368 = vcmask 523264
        %v370 = vsel %vm368, %v334, 0
        %372 = vmatprep.subr.bf16.mxu0 0
        %373 = vmatpush1.bf16.msra.mxu0 %v360
        %374 = vmatprep.subr.bf16.mxu0 0
        %375 = vmatpush1.bf16.msra.mxu0 %v361
        %376 = vmatprep.subr.bf16.mxu0 0
        %377 = vmatpush1.bf16.msra.mxu0 %v362
        %378 = vmatprep.subr.bf16.mxu0 0
        %379 = vmatpush1.bf16.msra.mxu0 %v363
        %380 = vmatprep.subr.bf16.mxu0 0
        %381 = vmatpush1.bf16.msra.mxu0 0
        %382 = vmatprep.subr.bf16.mxu0 0
        %383 = vmatpush1.bf16.msra.mxu0 0
        %384 = vmatprep.subr.bf16.mxu0 0
        %385 = vmatpush1.bf16.msra.mxu0 0
        %386 = vmatprep.subr.bf16.mxu0 0
        %387 = vmatpush1.bf16.msra.mxu0 0
        %388 = vmatprep.subr.bf16.mxu0 0
        %389 = vmatpush1.bf16.msra.mxu0 0
        %390 = vmatprep.subr.bf16.mxu0 0
        %391 = vmatpush1.bf16.msra.mxu0 0
        %392 = vmatprep.subr.bf16.mxu0 0
        %393 = vmatpush1.bf16.msra.mxu0 0
        %394 = vmatprep.subr.bf16.mxu0 0
        %395 = vmatpush1.bf16.msra.mxu0 0
        %396 = vmatprep.subr.bf16.mxu0 0
        %397 = vmatpush1.bf16.msra.mxu0 0
        %398 = vmatprep.subr.bf16.mxu0 0
        %399 = vmatpush1.bf16.msra.mxu0 0
        %400 = vmatprep.subr.bf16.mxu0 0
        %401 = vmatpush1.bf16.msra.mxu0 0
        %402 = vmatprep.subr.bf16.mxu0 0
        %403 = vmatpush1.bf16.msra.mxu0 0
        %404 = vmatprep.mubr.bf16.mxu0 0
        %405 = vmatmul.mubr.bf16.gmra.mrb[0].mxu0 %v370
        %v406 = vpop.f32.mrb[0].mxu0
        %v407 = vadd.f32 0.0, %v406
        %v408 = vpop.f32.mrb[0].mxu0
        %v409 = vpop.f32.mrb[0].mxu0
        %v410 = vpop.f32.mrb[0].mxu0
        %411 = vdwg.mxu0
        %v412 = vadd.f32 %v335, %v407
        %413 = vst.msk [vmem:[#allocation3] sm:$0xff] %vm289, %v412
        // Predicated region
        $region41: #{tpu_custom_call.1} parent=35 // pred_check
          %p414 = pneg %p245
        $region42: #{tpu_custom_call.1} parent=35 // pred_check_branch
          %416 = sbr.rel (%p414) target = $region44
        $region43: #{tpu_custom_call.1} parent=35 // pred_region
          %v417 = vld [vmem:[%s233] sm:$0xff]
          %v418 = vld [vmem:[#allocation3] sm:$0xff]
          %v419 = vadd.f32 %v417, %v418
          %420 = vst.msk [vmem:[%s229] sm:$0xff] %vm289, %v419
        $region44: #{tpu_custom_call.1} parent=35 // pred_fallthru
          _
        %s421 = sand.u32 %s137, 1
        %s422 = scalar_lea.sflag [#allocation5], %s421
        %s423 = sand.u32 %s137, 1
        %s424 = smul.addr %s423, 8
        %s425 = scalar_lea.vmem [#allocation4], %s424
        // Predicated region
        $region45: #{tpu_custom_call.1} parent=35 // pred_check
          %p426 = pneg %p147
        $region46: #{tpu_custom_call.1} parent=35 // pred_check_branch
          %428 = sbr.rel (%p426) target = $region48
        $region47: #{tpu_custom_call.1} parent=35 // pred_region
          %s430 = ssub.s32 128, 128
          %431 = vsyncadd %s422, %s430
          %s432 = smul.addr %s22, 128
          %s433 = scalar_lea.hbm %s4, %s432
          %s435 = sshll.u32 %s425, 4
          %s436 = int_to_ptr.vmem [resolvable:$true] %s435
          %438 = dma.vmem_to_hbm [thread:$0]  %s436, 128, %s433, %s422
        $region48: #{tpu_custom_call.1} parent=35 // pred_fallthru
          _
      $region36: #{tpu_custom_call.1} parent=5 // pred_fallthru
        _
      %p439 = scmp.le.s32.totalorder 2, %s13
      // Predicated region
      $region49: #{tpu_custom_call.1} parent=5 // pred_check
        %p440 = pneg %p439
      $region50: #{tpu_custom_call.1} parent=5 // pred_check_branch
        %442 = sbr.rel (%p440) target = $region52
      $region51: #{tpu_custom_call.1} parent=5 // pred_region
        %s443 = ssub.s32 %s13, 2
        // Predicated region
        $region53: #{tpu_custom_call.1} parent=51 // pred_check
          %p444 = pneg %p153
        $region54: #{tpu_custom_call.1} parent=51 // pred_check_branch
          %446 = sbr.rel (%p444) target = $region56
        $region55: #{tpu_custom_call.1} parent=51 // pred_region
          %s447 = sand.u32 %s138, 1
          %s448 = scalar_lea.sflag [#allocation5], %s447
          %s449 = sand.u32 %s138, 1
          %s450 = smul.addr %s449, 8
          %s451 = scalar_lea.vmem [#allocation4], %s450
          %452 = dma.done %s448, 128
        $region56: #{tpu_custom_call.1} parent=51 // pred_fallthru
          _
      $region52: #{tpu_custom_call.1} parent=5 // pred_fallthru
        _
    $region6: #{tpu_custom_call.1} parent=1 // loop_footer
      %s17 = sadd.s32 1, %s13
    $region7: #{tpu_custom_call.1} parent=1 // loop_footer_branch
      %12 = sbr.rel target = $region3
    $region8: #{tpu_custom_call.1} parent=1 // loop_exit
      _
    %453 = vsyncpa [#allocation5], 1
    %s454 = scalar_lea.sflag [#allocation5], 1
    %455 = vsyncpa %s454, 1

</llo_original>
